<compile_context>
chip_gen: v5e
topology: v5e:2x2
jax: 0.10.0
libtpu: 0.0.40
codegen_flags: <defaults>
</compile_context>

<pallas_src>
import functools
import math

import jax
import jax.numpy as jnp
import numpy as np
from jax import lax
from jax.experimental import pallas as pl
from jax.experimental.pallas import tpu as pltpu

LEAKY_SLOPE = 0.01  # nn.LeakyReLU default


def _leaky(x):
    return jnp.where(x >= 0, x, LEAKY_SLOPE * x)


def _boundary_masks(H, W):
    """(9, H*W) f32 validity masks, tap order k = (dy+1)*3 + (dx+1). Static given H, W."""
    pos = np.arange(H * W)
    yy = pos // W
    xx = pos % W
    rows = []
    for dy in (-1, 0, 1):
        for dx in (-1, 0, 1):
            valid = ((yy + dy >= 0) & (yy + dy < H) &
                     (xx + dx >= 0) & (xx + dx < W))
            rows.append(valid.astype(np.float32))
    return np.stack(rows, axis=0)


def residual_kernel(x_ref, w1_ref, b1_ref, w2_ref, b2_ref, m_ref, o_ref,
                    stack_ref, *, W, Cpad):
    # x_ref block: (1, C, L) -- channels on sublanes, Bg images side-by-side on lanes.
    C = x_ref.shape[1]
    L = x_ref.shape[2]
    x = x_ref[0]                                     # (C, L) f32

    # Keep the zero-pad rows of each tap block actually zero: they meet zero weight
    # columns in the dot, but stale VMEM (NaN/Inf) * 0 would still poison the result.
    # "parallel" grid semantics means we can't rely on step 0 running first on every
    # core, so zero unconditionally (a few vreg stores; negligible).
    if Cpad > C:
        stack_ref[...] = jnp.zeros_like(stack_ref)

    # Static per-tap lane shifts, (dy, dx) row-major (matches mask rows & packed weights).
    taps = []
    k = 0
    for dy in (-1, 0, 1):
        for dx in (-1, 0, 1):
            s = dy * W + dx                          # flat-index offset of this tap
            taps.append((k, (-s) % L))               # roll so shifted[p] = v[p + s]
            k += 1

    def conv3x3(v, w_ref, b_ref):
        # Stack all 9 shifted+masked taps into (9*Cpad, L), then ONE MXU contraction:
        #   (C, 9*Cpad) @ (9*Cpad, L).  Tap blocks start at 8-aligned sublane offsets.
        for kk, shift in taps:
            if shift == 0:                           # center tap: no shift, always valid
                patch = v
            else:
                patch = pltpu.roll(v, shift=shift, axis=1) * m_ref[kk]
            stack_ref[pl.ds(kk * Cpad, C), :] = patch
        out = jnp.dot(w_ref[...], stack_ref[...],
                      preferred_element_type=jnp.float32)
        return out + b_ref[...]                      # (C,1) broadcast over lanes

    h1 = _leaky(conv3x3(x, w1_ref, b1_ref))          # conv1 + LeakyReLU
    h2 = conv3x3(h1, w2_ref, b2_ref)                 # conv2
    o_ref[0] = _leaky(h2 + x).astype(o_ref.dtype)    # residual add + LeakyReLU


def prepare_params(w1_oihw, b1, w2_oihw, b2):
    """Module-init-time parameter packing (hoisted out of the forward path).

    Packed weight: W_packed[co, k*Cpad + ci] = w[co, ci, ky, kx], k = ky*3 + kx,
    with each tap's channel block zero-padded from C to Cpad (multiple of 8).
    """
    C = w1_oihw.shape[0]
    Cpad = ((C + 7) // 8) * 8

    def pack(w):
        wt = jnp.transpose(w, (2, 3, 0, 1)).reshape(9, C, C)        # [k, co, ci]
        wt = jnp.pad(wt, ((0, 0), (0, 0), (0, Cpad - C)))           # [k, co, Cpad]
        return jnp.transpose(wt, (1, 0, 2)).reshape(C, 9 * Cpad)    # [co, k*Cpad+ci]

    return pack(w1_oihw), b1.reshape(C, 1), pack(w2_oihw), b2.reshape(C, 1), Cpad


def residual_forward(x_nchw, params):
    """x_nchw: (B, C, H, W). Returns (B, C, H, W), matching the PyTorch module."""
    w1p, b1c, w2p, b2c, Cpad = params
    B, C, H, W = x_nchw.shape
    HW = H * W

    # >=2 parallel grid steps so both v7x TensorCores work; as few steps as possible
    # so per-step overhead is amortized.  (G=1 fallback for odd batch sizes.)
    G = 2 if (B >= 2 and B % 2 == 0) else 1
    Bg = B // G
    L = Bg * HW                                      # lane extent (multiple of 128)

    # Layout: (G, C, Bg*HW). Small wrapper transpose (a few KB); activations inside
    # the kernel stay lane-dense with no in-kernel relayouts.
    xg = x_nchw.reshape(G, Bg, C, HW).transpose(0, 2, 1, 3).reshape(G, C, L)

    # Precomputed boundary masks, tiled per image across the lane block (grid-invariant).
    masks = jnp.asarray(np.tile(_boundary_masks(H, W), (1, Bg)).reshape(9, 1, L))

    kernel = functools.partial(residual_kernel, W=W, Cpad=Cpad)

    out = pl.pallas_call(
        kernel,
        out_shape=jax.ShapeDtypeStruct((G, C, L), x_nchw.dtype),
        grid_spec=pltpu.PrefetchScalarGridSpec(
            num_scalar_prefetch=0,
            grid=(G,),
            in_specs=[
                pl.BlockSpec((1, C, L), lambda g: (g, 0, 0)),        # activations
                pl.BlockSpec((C, 9 * Cpad), lambda g: (0, 0)),       # packed W1 (resident)
                pl.BlockSpec((C, 1), lambda g: (0, 0)),              # b1
                pl.BlockSpec((C, 9 * Cpad), lambda g: (0, 0)),       # packed W2 (resident)
                pl.BlockSpec((C, 1), lambda g: (0, 0)),              # b2
                pl.BlockSpec((9, 1, L), lambda g: (0, 0, 0)),        # boundary masks
            ],
            out_specs=pl.BlockSpec((1, C, L), lambda g: (g, 0, 0)),
            scratch_shapes=[pltpu.VMEM((9 * Cpad, L), jnp.float32)],  # stacked taps
        ),
        compiler_params=pltpu.CompilerParams(
            dimension_semantics=("parallel",)),
        # NOTE: no input_output_aliases -- without jit argument donation it only adds
        # a defensive copy of x instead of saving an HBM buffer.
    )(xg, w1p, b1c, w2p, b2c, masks)

    return out.reshape(G, C, Bg, HW).transpose(0, 2, 1, 3).reshape(B, C, H, W)


def xavier_uniform_conv(key, ch):
    # nn.init.xavier_uniform_ on Conv2d(ch, ch, 3): fan_in = fan_out = ch*9
    bound = math.sqrt(6.0 / (ch * 9 + ch * 9))
    return jax.random.uniform(key, (ch, ch, 3, 3), jnp.float32, -bound, bound)


def reference_forward(x, w1, b1, w2, b2):
    """Pure-JAX reference (NCHW, same as PyTorch) for correctness check."""
    dn = lax.conv_dimension_numbers(x.shape, w1.shape, ("NCHW", "OIHW", "NCHW"))
    conv = lambda inp, w, b: lax.conv_general_dilated(
        inp, w, (1, 1), ((1, 1), (1, 1)), dimension_numbers=dn) + b[None, :, None, None]
    out = conv(x, w1, b1)
    out = conv(_leaky(out), w2, b2)
    return _leaky(out + x)


if __name__ == "__main__":
    key = jax.random.PRNGKey(0)
    k_x, k_w1, k_w2 = jax.random.split(key, 3)

    B, C, H, W = 2, 4, 16, 16
    x = jax.random.normal(k_x, (B, C, H, W), jnp.float32)

    w1 = xavier_uniform_conv(k_w1, C)
    b1 = jnp.zeros((C,), jnp.float32)   # nn.init.constant_(bias, 0)
    w2 = xavier_uniform_conv(k_w2, C)
    b2 = jnp.zeros((C,), jnp.float32)

    # Parameter packing happens once (module init), not per forward call.
    params = prepare_params(w1, b1, w2, b2)

    ref = jax.block_until_ready(reference_forward(x, w1, b1, w2, b2))

    out = jax.block_until_ready(residual_forward(x, params))

    np.testing.assert_allclose(np.asarray(out), np.asarray(ref), atol=1e-5, rtol=1e-5)

    print("KERNEL_OK")
</pallas_src>

<mosaic_0001>
module attributes {stable_mosaic.version = 11 : i64} {
  func.func @residual_kernel(%arg0: i32, %arg1: memref<1x4x256xf32, #tpu.memory_space<vmem>>, %arg2: memref<4x72xf32, #tpu.memory_space<vmem>>, %arg3: memref<4x1xf32, #tpu.memory_space<vmem>>, %arg4: memref<4x72xf32, #tpu.memory_space<vmem>>, %arg5: memref<4x1xf32, #tpu.memory_space<vmem>>, %arg6: memref<9x1x256xf32, #tpu.memory_space<vmem>>, %arg7: memref<1x4x256xf32, #tpu.memory_space<vmem>>, %arg8: memref<72x256xf32, #tpu.memory_space<vmem>>) attributes {dimension_semantics = [#tpu.dimension_semantics<parallel>], iteration_bounds = array<i64: 2>, scalar_prefetch = 0 : i64, scratch_operands = 1 : i64, tpu.core_type = #tpu.core_type<tc>, window_params = [{transform_indices = @transform_0, window_bounds = array<i64: 1, 4, 256>}, {pipeline_mode = #tpu.pipeline_mode<synchronous>, transform_indices = @transform_1, window_bounds = array<i64: 4, 72>}, {pipeline_mode = #tpu.pipeline_mode<synchronous>, transform_indices = @transform_2, window_bounds = array<i64: 4, 1>}, {pipeline_mode = #tpu.pipeline_mode<synchronous>, transform_indices = @transform_3, window_bounds = array<i64: 4, 72>}, {pipeline_mode = #tpu.pipeline_mode<synchronous>, transform_indices = @transform_4, window_bounds = array<i64: 4, 1>}, {pipeline_mode = #tpu.pipeline_mode<synchronous>, transform_indices = @transform_5, window_bounds = array<i64: 9, 1, 256>}, {transform_indices = @transform_6, window_bounds = array<i64: 1, 4, 256>}]} {
    %c0 = arith.constant 0 : index
    %c0_0 = arith.constant 0 : index
    %c0_1 = arith.constant 0 : index
    %0 = vector.load %arg1[%c0, %c0_0, %c0_1] : memref<1x4x256xf32, #tpu.memory_space<vmem>>, vector<1x4x256xf32>
    %1 = vector.shape_cast %0 : vector<1x4x256xf32> to vector<4x256xf32>
    %cst = arith.constant 0.000000e+00 : f32
    %2 = vector.broadcast %cst : f32 to vector<72x256xf32>
    %c0_2 = arith.constant 0 : index
    %c0_3 = arith.constant 0 : index
    %3 = vector.load %arg8[%c0_2, %c0_3] : memref<72x256xf32, #tpu.memory_space<vmem>>, vector<72x256xf32>
    tpu.vector_store %arg8[%c0_2, %c0_3], %2 {strides = array<i32>} : memref<72x256xf32, #tpu.memory_space<vmem>>, vector<72x256xf32>,
    %c17_i32 = arith.constant 17 : i32
    %4 = tpu.dynamic_rotate %1 by %c17_i32 dim 1 : vector<4x256xf32>, i32 -> vector<4x256xf32>
    %c0_4 = arith.constant 0 : index
    %c0_5 = arith.constant 0 : index
    %c0_6 = arith.constant 0 : index
    %5 = vector.load %arg6[%c0_4, %c0_5, %c0_6] : memref<9x1x256xf32, #tpu.memory_space<vmem>>, vector<1x1x256xf32>
    %6 = vector.shape_cast %5 : vector<1x1x256xf32> to vector<1x256xf32>
    %7 = vector.broadcast %6 : vector<1x256xf32> to vector<4x256xf32>
    %8 = arith.mulf %4, %7 : vector<4x256xf32>
    %c0_7 = arith.constant 0 : index
    %c0_8 = arith.constant 0 : index
    %9 = vector.load %arg8[%c0_7, %c0_8] : memref<72x256xf32, #tpu.memory_space<vmem>>, vector<4x256xf32>
    tpu.vector_store %arg8[%c0_7, %c0_8], %8 {strides = array<i32>} : memref<72x256xf32, #tpu.memory_space<vmem>>, vector<4x256xf32>,
    %c16_i32 = arith.constant 16 : i32
    %10 = tpu.dynamic_rotate %1 by %c16_i32 dim 1 : vector<4x256xf32>, i32 -> vector<4x256xf32>
    %c1 = arith.constant 1 : index
    %c0_9 = arith.constant 0 : index
    %c0_10 = arith.constant 0 : index
    %11 = vector.load %arg6[%c1, %c0_9, %c0_10] : memref<9x1x256xf32, #tpu.memory_space<vmem>>, vector<1x1x256xf32>
    %12 = vector.shape_cast %11 : vector<1x1x256xf32> to vector<1x256xf32>
    %13 = vector.broadcast %12 : vector<1x256xf32> to vector<4x256xf32>
    %14 = arith.mulf %10, %13 : vector<4x256xf32>
    %c8 = arith.constant 8 : index
    %c0_11 = arith.constant 0 : index
    %15 = vector.load %arg8[%c8, %c0_11] : memref<72x256xf32, #tpu.memory_space<vmem>>, vector<4x256xf32>
    tpu.vector_store %arg8[%c8, %c0_11], %14 {strides = array<i32>} : memref<72x256xf32, #tpu.memory_space<vmem>>, vector<4x256xf32>,
    %c15_i32 = arith.constant 15 : i32
    %16 = tpu.dynamic_rotate %1 by %c15_i32 dim 1 : vector<4x256xf32>, i32 -> vector<4x256xf32>
    %c2 = arith.constant 2 : index
    %c0_12 = arith.constant 0 : index
    %c0_13 = arith.constant 0 : index
    %17 = vector.load %arg6[%c2, %c0_12, %c0_13] : memref<9x1x256xf32, #tpu.memory_space<vmem>>, vector<1x1x256xf32>
    %18 = vector.shape_cast %17 : vector<1x1x256xf32> to vector<1x256xf32>
    %19 = vector.broadcast %18 : vector<1x256xf32> to vector<4x256xf32>
    %20 = arith.mulf %16, %19 : vector<4x256xf32>
    %c16 = arith.constant 16 : index
    %c0_14 = arith.constant 0 : index
    %21 = vector.load %arg8[%c16, %c0_14] : memref<72x256xf32, #tpu.memory_space<vmem>>, vector<4x256xf32>
    tpu.vector_store %arg8[%c16, %c0_14], %20 {strides = array<i32>} : memref<72x256xf32, #tpu.memory_space<vmem>>, vector<4x256xf32>,
    %c1_i32 = arith.constant 1 : i32
    %22 = tpu.dynamic_rotate %1 by %c1_i32 dim 1 : vector<4x256xf32>, i32 -> vector<4x256xf32>
    %c3 = arith.constant 3 : index
    %c0_15 = arith.constant 0 : index
    %c0_16 = arith.constant 0 : index
    %23 = vector.load %arg6[%c3, %c0_15, %c0_16] : memref<9x1x256xf32, #tpu.memory_space<vmem>>, vector<1x1x256xf32>
    %24 = vector.shape_cast %23 : vector<1x1x256xf32> to vector<1x256xf32>
    %25 = vector.broadcast %24 : vector<1x256xf32> to vector<4x256xf32>
    %26 = arith.mulf %22, %25 : vector<4x256xf32>
    %c24 = arith.constant 24 : index
    %c0_17 = arith.constant 0 : index
    %27 = vector.load %arg8[%c24, %c0_17] : memref<72x256xf32, #tpu.memory_space<vmem>>, vector<4x256xf32>
    tpu.vector_store %arg8[%c24, %c0_17], %26 {strides = array<i32>} : memref<72x256xf32, #tpu.memory_space<vmem>>, vector<4x256xf32>,
    %c32 = arith.constant 32 : index
    %c0_18 = arith.constant 0 : index
    %28 = vector.load %arg8[%c32, %c0_18] : memref<72x256xf32, #tpu.memory_space<vmem>>, vector<4x256xf32>
    tpu.vector_store %arg8[%c32, %c0_18], %1 {strides = array<i32>} : memref<72x256xf32, #tpu.memory_space<vmem>>, vector<4x256xf32>,
    %c255_i32 = arith.constant 255 : i32
    %29 = tpu.dynamic_rotate %1 by %c255_i32 dim 1 : vector<4x256xf32>, i32 -> vector<4x256xf32>
    %c5 = arith.constant 5 : index
    %c0_19 = arith.constant 0 : index
    %c0_20 = arith.constant 0 : index
    %30 = vector.load %arg6[%c5, %c0_19, %c0_20] : memref<9x1x256xf32, #tpu.memory_space<vmem>>, vector<1x1x256xf32>
    %31 = vector.shape_cast %30 : vector<1x1x256xf32> to vector<1x256xf32>
    %32 = vector.broadcast %31 : vector<1x256xf32> to vector<4x256xf32>
    %33 = arith.mulf %29, %32 : vector<4x256xf32>
    %c40 = arith.constant 40 : index
    %c0_21 = arith.constant 0 : index
    %34 = vector.load %arg8[%c40, %c0_21] : memref<72x256xf32, #tpu.memory_space<vmem>>, vector<4x256xf32>
    tpu.vector_store %arg8[%c40, %c0_21], %33 {strides = array<i32>} : memref<72x256xf32, #tpu.memory_space<vmem>>, vector<4x256xf32>,
    %c241_i32 = arith.constant 241 : i32
    %35 = tpu.dynamic_rotate %1 by %c241_i32 dim 1 : vector<4x256xf32>, i32 -> vector<4x256xf32>
    %c6 = arith.constant 6 : index
    %c0_22 = arith.constant 0 : index
    %c0_23 = arith.constant 0 : index
    %36 = vector.load %arg6[%c6, %c0_22, %c0_23] : memref<9x1x256xf32, #tpu.memory_space<vmem>>, vector<1x1x256xf32>
    %37 = vector.shape_cast %36 : vector<1x1x256xf32> to vector<1x256xf32>
    %38 = vector.broadcast %37 : vector<1x256xf32> to vector<4x256xf32>
    %39 = arith.mulf %35, %38 : vector<4x256xf32>
    %c48 = arith.constant 48 : index
    %c0_24 = arith.constant 0 : index
    %40 = vector.load %arg8[%c48, %c0_24] : memref<72x256xf32, #tpu.memory_space<vmem>>, vector<4x256xf32>
    tpu.vector_store %arg8[%c48, %c0_24], %39 {strides = array<i32>} : memref<72x256xf32, #tpu.memory_space<vmem>>, vector<4x256xf32>,
    %c240_i32 = arith.constant 240 : i32
    %41 = tpu.dynamic_rotate %1 by %c240_i32 dim 1 : vector<4x256xf32>, i32 -> vector<4x256xf32>
    %c7 = arith.constant 7 : index
    %c0_25 = arith.constant 0 : index
    %c0_26 = arith.constant 0 : index
    %42 = vector.load %arg6[%c7, %c0_25, %c0_26] : memref<9x1x256xf32, #tpu.memory_space<vmem>>, vector<1x1x256xf32>
    %43 = vector.shape_cast %42 : vector<1x1x256xf32> to vector<1x256xf32>
    %44 = vector.broadcast %43 : vector<1x256xf32> to vector<4x256xf32>
    %45 = arith.mulf %41, %44 : vector<4x256xf32>
    %c56 = arith.constant 56 : index
    %c0_27 = arith.constant 0 : index
    %46 = vector.load %arg8[%c56, %c0_27] : memref<72x256xf32, #tpu.memory_space<vmem>>, vector<4x256xf32>
    tpu.vector_store %arg8[%c56, %c0_27], %45 {strides = array<i32>} : memref<72x256xf32, #tpu.memory_space<vmem>>, vector<4x256xf32>,
    %c239_i32 = arith.constant 239 : i32
    %47 = tpu.dynamic_rotate %1 by %c239_i32 dim 1 : vector<4x256xf32>, i32 -> vector<4x256xf32>
    %c8_28 = arith.constant 8 : index
    %c0_29 = arith.constant 0 : index
    %c0_30 = arith.constant 0 : index
    %48 = vector.load %arg6[%c8_28, %c0_29, %c0_30] : memref<9x1x256xf32, #tpu.memory_space<vmem>>, vector<1x1x256xf32>
    %49 = vector.shape_cast %48 : vector<1x1x256xf32> to vector<1x256xf32>
    %50 = vector.broadcast %49 : vector<1x256xf32> to vector<4x256xf32>
    %51 = arith.mulf %47, %50 : vector<4x256xf32>
    %c64 = arith.constant 64 : index
    %c0_31 = arith.constant 0 : index
    %52 = vector.load %arg8[%c64, %c0_31] : memref<72x256xf32, #tpu.memory_space<vmem>>, vector<4x256xf32>
    tpu.vector_store %arg8[%c64, %c0_31], %51 {strides = array<i32>} : memref<72x256xf32, #tpu.memory_space<vmem>>, vector<4x256xf32>,
    %c0_32 = arith.constant 0 : index
    %c0_33 = arith.constant 0 : index
    %53 = vector.load %arg2[%c0_32, %c0_33] : memref<4x72xf32, #tpu.memory_space<vmem>>, vector<4x72xf32>
    %c0_34 = arith.constant 0 : index
    %c0_35 = arith.constant 0 : index
    %54 = vector.load %arg8[%c0_34, %c0_35] : memref<72x256xf32, #tpu.memory_space<vmem>>, vector<72x256xf32>
    %cst_36 = arith.constant dense<0.000000e+00> : vector<4x256xf32>
    %55 = tpu.matmul %53, %54, %cst_36 {dimension_numbers = #tpu.dot_dimension_numbers<[1], [0], [0], [1], [0, 0, 1, 1], [], []>} : vector<4x72xf32>, vector<72x256xf32>, vector<4x256xf32> -> vector<4x256xf32>
    %c0_37 = arith.constant 0 : index
    %c0_38 = arith.constant 0 : index
    %56 = vector.load %arg3[%c0_37, %c0_38] : memref<4x1xf32, #tpu.memory_space<vmem>>, vector<4x1xf32>
    %57 = vector.broadcast %56 : vector<4x1xf32> to vector<4x256xf32>
    %58 = arith.addf %55, %57 : vector<4x256xf32>
    %cst_39 = arith.constant 0.000000e+00 : f32
    %59 = vector.broadcast %cst_39 : f32 to vector<4x256xf32>
    %60 = arith.cmpf oge, %58, %59 : vector<4x256xf32>
    %cst_40 = arith.constant 0.00999999977 : f32
    %61 = vector.broadcast %cst_40 : f32 to vector<4x256xf32>
    %62 = arith.mulf %61, %58 : vector<4x256xf32>
    %63 = arith.select %60, %58, %62 : vector<4x256xi1>, vector<4x256xf32>
    %c17_i32_41 = arith.constant 17 : i32
    %64 = tpu.dynamic_rotate %63 by %c17_i32_41 dim 1 : vector<4x256xf32>, i32 -> vector<4x256xf32>
    %c0_42 = arith.constant 0 : index
    %c0_43 = arith.constant 0 : index
    %c0_44 = arith.constant 0 : index
    %65 = vector.load %arg6[%c0_42, %c0_43, %c0_44] : memref<9x1x256xf32, #tpu.memory_space<vmem>>, vector<1x1x256xf32>
    %66 = vector.shape_cast %65 : vector<1x1x256xf32> to vector<1x256xf32>
    %67 = vector.broadcast %66 : vector<1x256xf32> to vector<4x256xf32>
    %68 = arith.mulf %64, %67 : vector<4x256xf32>
    %c0_45 = arith.constant 0 : index
    %c0_46 = arith.constant 0 : index
    %69 = vector.load %arg8[%c0_45, %c0_46] : memref<72x256xf32, #tpu.memory_space<vmem>>, vector<4x256xf32>
    tpu.vector_store %arg8[%c0_45, %c0_46], %68 {strides = array<i32>} : memref<72x256xf32, #tpu.memory_space<vmem>>, vector<4x256xf32>,
    %c16_i32_47 = arith.constant 16 : i32
    %70 = tpu.dynamic_rotate %63 by %c16_i32_47 dim 1 : vector<4x256xf32>, i32 -> vector<4x256xf32>
    %c1_48 = arith.constant 1 : index
    %c0_49 = arith.constant 0 : index
    %c0_50 = arith.constant 0 : index
    %71 = vector.load %arg6[%c1_48, %c0_49, %c0_50] : memref<9x1x256xf32, #tpu.memory_space<vmem>>, vector<1x1x256xf32>
    %72 = vector.shape_cast %71 : vector<1x1x256xf32> to vector<1x256xf32>
    %73 = vector.broadcast %72 : vector<1x256xf32> to vector<4x256xf32>
    %74 = arith.mulf %70, %73 : vector<4x256xf32>
    %c8_51 = arith.constant 8 : index
    %c0_52 = arith.constant 0 : index
    %75 = vector.load %arg8[%c8_51, %c0_52] : memref<72x256xf32, #tpu.memory_space<vmem>>, vector<4x256xf32>
    tpu.vector_store %arg8[%c8_51, %c0_52], %74 {strides = array<i32>} : memref<72x256xf32, #tpu.memory_space<vmem>>, vector<4x256xf32>,
    %c15_i32_53 = arith.constant 15 : i32
    %76 = tpu.dynamic_rotate %63 by %c15_i32_53 dim 1 : vector<4x256xf32>, i32 -> vector<4x256xf32>
    %c2_54 = arith.constant 2 : index
    %c0_55 = arith.constant 0 : index
    %c0_56 = arith.constant 0 : index
    %77 = vector.load %arg6[%c2_54, %c0_55, %c0_56] : memref<9x1x256xf32, #tpu.memory_space<vmem>>, vector<1x1x256xf32>
    %78 = vector.shape_cast %77 : vector<1x1x256xf32> to vector<1x256xf32>
    %79 = vector.broadcast %78 : vector<1x256xf32> to vector<4x256xf32>
    %80 = arith.mulf %76, %79 : vector<4x256xf32>
    %c16_57 = arith.constant 16 : index
    %c0_58 = arith.constant 0 : index
    %81 = vector.load %arg8[%c16_57, %c0_58] : memref<72x256xf32, #tpu.memory_space<vmem>>, vector<4x256xf32>
    tpu.vector_store %arg8[%c16_57, %c0_58], %80 {strides = array<i32>} : memref<72x256xf32, #tpu.memory_space<vmem>>, vector<4x256xf32>,
    %c1_i32_59 = arith.constant 1 : i32
    %82 = tpu.dynamic_rotate %63 by %c1_i32_59 dim 1 : vector<4x256xf32>, i32 -> vector<4x256xf32>
    %c3_60 = arith.constant 3 : index
    %c0_61 = arith.constant 0 : index
    %c0_62 = arith.constant 0 : index
    %83 = vector.load %arg6[%c3_60, %c0_61, %c0_62] : memref<9x1x256xf32, #tpu.memory_space<vmem>>, vector<1x1x256xf32>
    %84 = vector.shape_cast %83 : vector<1x1x256xf32> to vector<1x256xf32>
    %85 = vector.broadcast %84 : vector<1x256xf32> to vector<4x256xf32>
    %86 = arith.mulf %82, %85 : vector<4x256xf32>
    %c24_63 = arith.constant 24 : index
    %c0_64 = arith.constant 0 : index
    %87 = vector.load %arg8[%c24_63, %c0_64] : memref<72x256xf32, #tpu.memory_space<vmem>>, vector<4x256xf32>
    tpu.vector_store %arg8[%c24_63, %c0_64], %86 {strides = array<i32>} : memref<72x256xf32, #tpu.memory_space<vmem>>, vector<4x256xf32>,
    %c32_65 = arith.constant 32 : index
    %c0_66 = arith.constant 0 : index
    %88 = vector.load %arg8[%c32_65, %c0_66] : memref<72x256xf32, #tpu.memory_space<vmem>>, vector<4x256xf32>
    tpu.vector_store %arg8[%c32_65, %c0_66], %63 {strides = array<i32>} : memref<72x256xf32, #tpu.memory_space<vmem>>, vector<4x256xf32>,
    %c255_i32_67 = arith.constant 255 : i32
    %89 = tpu.dynamic_rotate %63 by %c255_i32_67 dim 1 : vector<4x256xf32>, i32 -> vector<4x256xf32>
    %c5_68 = arith.constant 5 : index
    %c0_69 = arith.constant 0 : index
    %c0_70 = arith.constant 0 : index
    %90 = vector.load %arg6[%c5_68, %c0_69, %c0_70] : memref<9x1x256xf32, #tpu.memory_space<vmem>>, vector<1x1x256xf32>
    %91 = vector.shape_cast %90 : vector<1x1x256xf32> to vector<1x256xf32>
    %92 = vector.broadcast %91 : vector<1x256xf32> to vector<4x256xf32>
    %93 = arith.mulf %89, %92 : vector<4x256xf32>
    %c40_71 = arith.constant 40 : index
    %c0_72 = arith.constant 0 : index
    %94 = vector.load %arg8[%c40_71, %c0_72] : memref<72x256xf32, #tpu.memory_space<vmem>>, vector<4x256xf32>
    tpu.vector_store %arg8[%c40_71, %c0_72], %93 {strides = array<i32>} : memref<72x256xf32, #tpu.memory_space<vmem>>, vector<4x256xf32>,
    %c241_i32_73 = arith.constant 241 : i32
    %95 = tpu.dynamic_rotate %63 by %c241_i32_73 dim 1 : vector<4x256xf32>, i32 -> vector<4x256xf32>
    %c6_74 = arith.constant 6 : index
    %c0_75 = arith.constant 0 : index
    %c0_76 = arith.constant 0 : index
    %96 = vector.load %arg6[%c6_74, %c0_75, %c0_76] : memref<9x1x256xf32, #tpu.memory_space<vmem>>, vector<1x1x256xf32>
    %97 = vector.shape_cast %96 : vector<1x1x256xf32> to vector<1x256xf32>
    %98 = vector.broadcast %97 : vector<1x256xf32> to vector<4x256xf32>
    %99 = arith.mulf %95, %98 : vector<4x256xf32>
    %c48_77 = arith.constant 48 : index
    %c0_78 = arith.constant 0 : index
    %100 = vector.load %arg8[%c48_77, %c0_78] : memref<72x256xf32, #tpu.memory_space<vmem>>, vector<4x256xf32>
    tpu.vector_store %arg8[%c48_77, %c0_78], %99 {strides = array<i32>} : memref<72x256xf32, #tpu.memory_space<vmem>>, vector<4x256xf32>,
    %c240_i32_79 = arith.constant 240 : i32
    %101 = tpu.dynamic_rotate %63 by %c240_i32_79 dim 1 : vector<4x256xf32>, i32 -> vector<4x256xf32>
    %c7_80 = arith.constant 7 : index
    %c0_81 = arith.constant 0 : index
    %c0_82 = arith.constant 0 : index
    %102 = vector.load %arg6[%c7_80, %c0_81, %c0_82] : memref<9x1x256xf32, #tpu.memory_space<vmem>>, vector<1x1x256xf32>
    %103 = vector.shape_cast %102 : vector<1x1x256xf32> to vector<1x256xf32>
    %104 = vector.broadcast %103 : vector<1x256xf32> to vector<4x256xf32>
    %105 = arith.mulf %101, %104 : vector<4x256xf32>
    %c56_83 = arith.constant 56 : index
    %c0_84 = arith.constant 0 : index
    %106 = vector.load %arg8[%c56_83, %c0_84] : memref<72x256xf32, #tpu.memory_space<vmem>>, vector<4x256xf32>
    tpu.vector_store %arg8[%c56_83, %c0_84], %105 {strides = array<i32>} : memref<72x256xf32, #tpu.memory_space<vmem>>, vector<4x256xf32>,
    %c239_i32_85 = arith.constant 239 : i32
    %107 = tpu.dynamic_rotate %63 by %c239_i32_85 dim 1 : vector<4x256xf32>, i32 -> vector<4x256xf32>
    %c8_86 = arith.constant 8 : index
    %c0_87 = arith.constant 0 : index
    %c0_88 = arith.constant 0 : index
    %108 = vector.load %arg6[%c8_86, %c0_87, %c0_88] : memref<9x1x256xf32, #tpu.memory_space<vmem>>, vector<1x1x256xf32>
    %109 = vector.shape_cast %108 : vector<1x1x256xf32> to vector<1x256xf32>
    %110 = vector.broadcast %109 : vector<1x256xf32> to vector<4x256xf32>
    %111 = arith.mulf %107, %110 : vector<4x256xf32>
    %c64_89 = arith.constant 64 : index
    %c0_90 = arith.constant 0 : index
    %112 = vector.load %arg8[%c64_89, %c0_90] : memref<72x256xf32, #tpu.memory_space<vmem>>, vector<4x256xf32>
    tpu.vector_store %arg8[%c64_89, %c0_90], %111 {strides = array<i32>} : memref<72x256xf32, #tpu.memory_space<vmem>>, vector<4x256xf32>,
    %c0_91 = arith.constant 0 : index
    %c0_92 = arith.constant 0 : index
    %113 = vector.load %arg4[%c0_91, %c0_92] : memref<4x72xf32, #tpu.memory_space<vmem>>, vector<4x72xf32>
    %c0_93 = arith.constant 0 : index
    %c0_94 = arith.constant 0 : index
    %114 = vector.load %arg8[%c0_93, %c0_94] : memref<72x256xf32, #tpu.memory_space<vmem>>, vector<72x256xf32>
    %cst_95 = arith.constant dense<0.000000e+00> : vector<4x256xf32>
    %115 = tpu.matmul %113, %114, %cst_95 {dimension_numbers = #tpu.dot_dimension_numbers<[1], [0], [0], [1], [0, 0, 1, 1], [], []>} : vector<4x72xf32>, vector<72x256xf32>, vector<4x256xf32> -> vector<4x256xf32>
    %c0_96 = arith.constant 0 : index
    %c0_97 = arith.constant 0 : index
    %116 = vector.load %arg5[%c0_96, %c0_97] : memref<4x1xf32, #tpu.memory_space<vmem>>, vector<4x1xf32>
    %117 = vector.broadcast %116 : vector<4x1xf32> to vector<4x256xf32>
    %118 = arith.addf %115, %117 : vector<4x256xf32>
    %119 = arith.addf %118, %1 : vector<4x256xf32>
    %cst_98 = arith.constant 0.000000e+00 : f32
    %120 = vector.broadcast %cst_98 : f32 to vector<4x256xf32>
    %121 = arith.cmpf oge, %119, %120 : vector<4x256xf32>
    %cst_99 = arith.constant 0.00999999977 : f32
    %122 = vector.broadcast %cst_99 : f32 to vector<4x256xf32>
    %123 = arith.mulf %122, %119 : vector<4x256xf32>
    %124 = arith.select %121, %119, %123 : vector<4x256xi1>, vector<4x256xf32>
    %c0_100 = arith.constant 0 : index
    %c0_101 = arith.constant 0 : index
    %c0_102 = arith.constant 0 : index
    %125 = vector.load %arg7[%c0_100, %c0_101, %c0_102] : memref<1x4x256xf32, #tpu.memory_space<vmem>>, vector<1x4x256xf32>
    %126 = vector.shape_cast %125 : vector<1x4x256xf32> to vector<4x256xf32>
    %127 = vector.shape_cast %124 : vector<4x256xf32> to vector<1x4x256xf32>
    tpu.vector_store %arg7[%c0_100, %c0_101, %c0_102], %127 {strides = array<i32>} : memref<1x4x256xf32, #tpu.memory_space<vmem>>, vector<1x4x256xf32>,
    return
  }
  func.func @transform_0(%arg0: i32) -> (i32, i32, i32) {
    %c0_i32 = arith.constant 0 : i32
    %c0_i32_0 = arith.constant 0 : i32
    %c0_i32_1 = arith.constant 0 : i32
    return %arg0, %c0_i32, %c0_i32_0 : i32, i32, i32
  }
  func.func @transform_1(%arg0: i32) -> (i32, i32) {
    %c0_i32 = arith.constant 0 : i32
    %c0_i32_0 = arith.constant 0 : i32
    %c0_i32_1 = arith.constant 0 : i32
    return %c0_i32, %c0_i32_0 : i32, i32
  }
  func.func @transform_2(%arg0: i32) -> (i32, i32) {
    %c0_i32 = arith.constant 0 : i32
    %c0_i32_0 = arith.constant 0 : i32
    %c0_i32_1 = arith.constant 0 : i32
    return %c0_i32, %c0_i32_0 : i32, i32
  }
  func.func @transform_3(%arg0: i32) -> (i32, i32) {
    %c0_i32 = arith.constant 0 : i32
    %c0_i32_0 = arith.constant 0 : i32
    %c0_i32_1 = arith.constant 0 : i32
    return %c0_i32, %c0_i32_0 : i32, i32
  }
  func.func @transform_4(%arg0: i32) -> (i32, i32) {
    %c0_i32 = arith.constant 0 : i32
    %c0_i32_0 = arith.constant 0 : i32
    %c0_i32_1 = arith.constant 0 : i32
    return %c0_i32, %c0_i32_0 : i32, i32
  }
  func.func @transform_5(%arg0: i32) -> (i32, i32, i32) {
    %c0_i32 = arith.constant 0 : i32
    %c0_i32_0 = arith.constant 0 : i32
    %c0_i32_1 = arith.constant 0 : i32
    %c0_i32_2 = arith.constant 0 : i32
    return %c0_i32, %c0_i32_0, %c0_i32_1 : i32, i32, i32
  }
  func.func @transform_6(%arg0: i32) -> (i32, i32, i32) {
    %c0_i32 = arith.constant 0 : i32
    %c0_i32_0 = arith.constant 0 : i32
    %c0_i32_1 = arith.constant 0 : i32
    return %arg0, %c0_i32, %c0_i32_0 : i32, i32, i32
  }
}

</mosaic_0001>

<llo_original>
// kernel: tpu_custom_call.1
$region0: #{tpu_custom_call.1}
  #allocation0 [shape = 'u32[]', space=smem, size = 0x4, offset = 0x4, fixed_abs, tag = 'smem constant byte address 0x4 - core index']
  #allocation1 [shape = 'u32[72,128]{1,0:T(1,128)}', space=vmem, size = 0x9000, scoped, tag = 'internal scratch']
  #allocation2 [shape = 'f32[72,256]{1,0:T(8,128)}', space=vmem, size = 0x12000, scoped, tag = 'scratch operand']
  %s0 = inlined_call_operand.hbm [shape: f32[2,4,256], index: 0, kind: input, shape index: {}]
  %s1 = inlined_call_operand.vmem [shape: f32[4,72], index: 1, kind: input, shape index: {}]
  %s2 = inlined_call_operand.vmem [shape: f32[4,1], index: 2, kind: input, shape index: {}]
  %s3 = inlined_call_operand.vmem [shape: f32[4,72], index: 3, kind: input, shape index: {}]
  %s4 = inlined_call_operand.vmem [shape: f32[4,1], index: 4, kind: input, shape index: {}]
  %s5 = inlined_call_operand.hbm [shape: f32[9,1,256], index: 5, kind: input, shape index: {}]
  %s6 = inlined_call_operand.hbm [shape: f32[2,4,256], index: 6, kind: output, shape index: {}]
  %s7 = sld [smem:[#allocation0]]
  $region65: #{tpu_custom_call.1} parent=0
    _
  %s9 = ssub.s32 1, %s7
  %s10 = scalar_select 0, %s9, %s7
  $region1: #{tpu_custom_call.1} parent=0
    #allocation3 [shape = 'u8[8192]{0}', space=vmem, size = 0x2000, scoped, tag = 'input window, operand 0']
    #allocation4 [shape = 's32[2]{0}', space=sflag, size = 0x8, scoped, tag = 'scoped memory for tpu_custom_call.1']
    #allocation5 [shape = 's32[2]{0}', space=sflag, size = 0x8, scoped, tag = 'scoped memory for tpu_custom_call.1']
    #allocation6 [shape = 'u8[9216]{0}', space=vmem, size = 0x2400, scoped, tag = 'input window, operand 5, single buffered']
    #allocation7 [shape = 's32[1]{0}', space=sflag, size = 0x4, scoped, tag = 'scoped memory for tpu_custom_call.1']
    #allocation8 [shape = 'u8[8192]{0}', space=vmem, size = 0x2000, scoped, tag = 'output window, operand 0']
    %11 = vsyncpa [#allocation4], 0
    %s12 = scalar_lea.sflag [#allocation4], 1
    %13 = vsyncpa %s12, 0
    %14 = vsyncpa [#allocation7], 0
    %15 = vsyncpa [#allocation5], 0
    %s16 = scalar_lea.sflag [#allocation5], 1
    %17 = vsyncpa %s16, 0
    loop: start=0, step=1, limit=4
    $region2: #{tpu_custom_call.1} parent=1 // loop_pre_header
      _
    $region3: #{tpu_custom_call.1} parent=1 // loop_header
      %s19 = sphi 0, %s23
      %p20 = scmp.ge.s32.totalorder %s19, 4
      %s29 = sphi 0, %s31
      %s32 = sphi 0, %s29
      %s33 = sphi 0, %s32
      %s49 = sphi 0, %s33
      %s53 = sphi 0, %s53
      %s55 = sphi 0, %s53
      %s56 = sphi 0, %s55
      %s70 = sphi 0, %s56
      %s74 = sphi 0, %s74
      %s76 = sphi 0, %s74
      %s77 = sphi 0, %s76
      %s91 = sphi 0, %s77
      %s95 = sphi 0, %s95
      %s97 = sphi 0, %s95
      %s98 = sphi 0, %s97
      %s112 = sphi 0, %s98
      %s116 = sphi 0, %s116
      %s118 = sphi 0, %s116
      %s119 = sphi 0, %s118
      %s133 = sphi 0, %s119
      %s137 = sphi 0, %s137
      %s139 = sphi 0, %s137
      %s140 = sphi 0, %s139
      %s154 = sphi 0, %s140
      %s160 = sphi 0, %s162
      %s163 = sphi 0, %s160
      %s164 = sphi 0, %s163
      %s180 = sphi 0, %s164
    $region4: #{tpu_custom_call.1} parent=1 // loop_header_branch
      %22 = sbr.rel (%p20) target = $region8
    $region5: #{tpu_custom_call.1} parent=1 // loop_body
      %s24 = ssub.s32 %s19, 1
      %s25 = ssub.s32 %s19, 2
      %s26 = sadd.s32 %s19, 1
      %s27 = ssub.s32 %s19, %s26
      %p28 = scmp.eq.s32.totalorder %s27, 0
      %s30 = sadd.s32 %s29, 1
      %s31 = scalar_select %p28, %s29, %s30
      %p34 = pneg %p28
      %p35 = scmp.eq.s32.totalorder %s19, 1
      %p36 = por %p34, %p35
      %p37 = scmp.ne.s32.totalorder %s29, %s32
      %p38 = scmp.eq.s32.totalorder %s19, 0
      %p39 = por %p37, %p38
      %p40 = scmp.ne.s32.totalorder %s29, %s32
      %p41 = scmp.eq.s32.totalorder %s24, 1
      %p42 = por %p40, %p41
      %p43 = scmp.ne.s32.totalorder %s32, %s33
      %p44 = scmp.eq.s32.totalorder %s24, 0
      %p45 = por %p43, %p44
      %p46 = scmp.ne.s32.totalorder %s32, %s33
      %p47 = scmp.eq.s32.totalorder %s25, 1
      %p48 = por %p46, %p47
      %p50 = scmp.ne.s32.totalorder %s33, %s49
      %p51 = scmp.eq.s32.totalorder %s25, 0
      %p52 = por %p50, %p51
      %s54 = sadd.s32 %s53, 1
      %p57 = scmp.eq.s32.totalorder %s19, 1
      %p58 = scmp.ne.s32.totalorder %s53, %s55
      %p59 = scmp.eq.s32.totalorder %s19, 0
      %p60 = por %p58, %p59
      %p61 = scmp.ne.s32.totalorder %s53, %s55
      %p62 = scmp.eq.s32.totalorder %s24, 1
      %p63 = por %p61, %p62
      %p64 = scmp.ne.s32.totalorder %s55, %s56
      %p65 = scmp.eq.s32.totalorder %s24, 0
      %p66 = por %p64, %p65
      %p67 = scmp.ne.s32.totalorder %s55, %s56
      %p68 = scmp.eq.s32.totalorder %s25, 1
      %p69 = por %p67, %p68
      %p71 = scmp.ne.s32.totalorder %s56, %s70
      %p72 = scmp.eq.s32.totalorder %s25, 0
      %p73 = por %p71, %p72
      %s75 = sadd.s32 %s74, 1
      %p78 = scmp.eq.s32.totalorder %s19, 1
      %p79 = scmp.ne.s32.totalorder %s74, %s76
      %p80 = scmp.eq.s32.totalorder %s19, 0
      %p81 = por %p79, %p80
      %p82 = scmp.ne.s32.totalorder %s74, %s76
      %p83 = scmp.eq.s32.totalorder %s24, 1
      %p84 = por %p82, %p83
      %p85 = scmp.ne.s32.totalorder %s76, %s77
      %p86 = scmp.eq.s32.totalorder %s24, 0
      %p87 = por %p85, %p86
      %p88 = scmp.ne.s32.totalorder %s76, %s77
      %p89 = scmp.eq.s32.totalorder %s25, 1
      %p90 = por %p88, %p89
      %p92 = scmp.ne.s32.totalorder %s77, %s91
      %p93 = scmp.eq.s32.totalorder %s25, 0
      %p94 = por %p92, %p93
      %s96 = sadd.s32 %s95, 1
      %p99 = scmp.eq.s32.totalorder %s19, 1
      %p100 = scmp.ne.s32.totalorder %s95, %s97
      %p101 = scmp.eq.s32.totalorder %s19, 0
      %p102 = por %p100, %p101
      %p103 = scmp.ne.s32.totalorder %s95, %s97
      %p104 = scmp.eq.s32.totalorder %s24, 1
      %p105 = por %p103, %p104
      %p106 = scmp.ne.s32.totalorder %s97, %s98
      %p107 = scmp.eq.s32.totalorder %s24, 0
      %p108 = por %p106, %p107
      %p109 = scmp.ne.s32.totalorder %s97, %s98
      %p110 = scmp.eq.s32.totalorder %s25, 1
      %p111 = por %p109, %p110
      %p113 = scmp.ne.s32.totalorder %s98, %s112
      %p114 = scmp.eq.s32.totalorder %s25, 0
      %p115 = por %p113, %p114
      %s117 = sadd.s32 %s116, 1
      %p120 = scmp.eq.s32.totalorder %s19, 1
      %p121 = scmp.ne.s32.totalorder %s116, %s118
      %p122 = scmp.eq.s32.totalorder %s19, 0
      %p123 = por %p121, %p122
      %p124 = scmp.ne.s32.totalorder %s116, %s118
      %p125 = scmp.eq.s32.totalorder %s24, 1
      %p126 = por %p124, %p125
      %p127 = scmp.ne.s32.totalorder %s118, %s119
      %p128 = scmp.eq.s32.totalorder %s24, 0
      %p129 = por %p127, %p128
      %p130 = scmp.ne.s32.totalorder %s118, %s119
      %p131 = scmp.eq.s32.totalorder %s25, 1
      %p132 = por %p130, %p131
      %p134 = scmp.ne.s32.totalorder %s119, %s133
      %p135 = scmp.eq.s32.totalorder %s25, 0
      %p136 = por %p134, %p135
      %s138 = sadd.s32 %s137, 1
      %p141 = scmp.eq.s32.totalorder %s19, 1
      %p142 = scmp.ne.s32.totalorder %s137, %s139
      %p143 = scmp.eq.s32.totalorder %s19, 0
      %p144 = por %p142, %p143
      %p145 = scmp.ne.s32.totalorder %s137, %s139
      %p146 = scmp.eq.s32.totalorder %s24, 1
      %p147 = por %p145, %p146
      %p148 = scmp.ne.s32.totalorder %s139, %s140
      %p149 = scmp.eq.s32.totalorder %s24, 0
      %p150 = por %p148, %p149
      %p151 = scmp.ne.s32.totalorder %s139, %s140
      %p152 = scmp.eq.s32.totalorder %s25, 1
      %p153 = por %p151, %p152
      %p155 = scmp.ne.s32.totalorder %s140, %s154
      %p156 = scmp.eq.s32.totalorder %s25, 0
      %p157 = por %p155, %p156
      %s158 = ssub.s32 %s19, %s26
      %p159 = scmp.eq.s32.totalorder %s158, 0
      %s161 = sadd.s32 %s160, 1
      %s162 = scalar_select %p159, %s160, %s161
      %p165 = pneg %p159
      %p166 = scmp.eq.s32.totalorder %s19, 1
      %p167 = por %p165, %p166
      %p168 = scmp.ne.s32.totalorder %s160, %s163
      %p169 = scmp.eq.s32.totalorder %s19, 0
      %p170 = por %p168, %p169
      %p171 = scmp.ne.s32.totalorder %s160, %s163
      %p172 = scmp.eq.s32.totalorder %s24, 1
      %p173 = por %p171, %p172
      %p174 = scmp.ne.s32.totalorder %s163, %s164
      %p175 = scmp.eq.s32.totalorder %s24, 0
      %p176 = por %p174, %p175
      %p177 = scmp.ne.s32.totalorder %s163, %s164
      %p178 = scmp.eq.s32.totalorder %s25, 1
      %p179 = por %p177, %p178
      %p181 = scmp.ne.s32.totalorder %s164, %s180
      %p182 = scmp.eq.s32.totalorder %s25, 0
      %p183 = por %p181, %p182
      %p184 = scmp.le.s32.totalorder 1, %s19
      %p185 = scmp.lt.s32.totalorder %s19, 3
      %p186 = pnand %p184, %p185
      %p187 = pneg %p186
      // Predicated region
      $region9: #{tpu_custom_call.1} parent=5 // pred_check
        _
      $region10: #{tpu_custom_call.1} parent=5 // pred_check_branch
        %189 = sbr.rel (%p186) target = $region12
      $region11: #{tpu_custom_call.1} parent=5 // pred_region
        %s190 = ssub.s32 %s19, 1
        // Predicated region
        $region13: #{tpu_custom_call.1} parent=11 // pred_check
          %p191 = pneg %p66
        $region14: #{tpu_custom_call.1} parent=11 // pred_check_branch
          %193 = sbr.rel (%p191) target = $region16
        $region15: #{tpu_custom_call.1} parent=11 // pred_region
          _
        $region16: #{tpu_custom_call.1} parent=11 // pred_fallthru
          _
        // Predicated region
        $region17: #{tpu_custom_call.1} parent=11 // pred_check
          %p194 = pneg %p87
        $region18: #{tpu_custom_call.1} parent=11 // pred_check_branch
          %196 = sbr.rel (%p194) target = $region20
        $region19: #{tpu_custom_call.1} parent=11 // pred_region
          _
        $region20: #{tpu_custom_call.1} parent=11 // pred_fallthru
          _
        // Predicated region
        $region21: #{tpu_custom_call.1} parent=11 // pred_check
          %p197 = pneg %p108
        $region22: #{tpu_custom_call.1} parent=11 // pred_check_branch
          %199 = sbr.rel (%p197) target = $region24
        $region23: #{tpu_custom_call.1} parent=11 // pred_region
          _
        $region24: #{tpu_custom_call.1} parent=11 // pred_fallthru
          _
        // Predicated region
        $region25: #{tpu_custom_call.1} parent=11 // pred_check
          %p200 = pneg %p129
        $region26: #{tpu_custom_call.1} parent=11 // pred_check_branch
          %202 = sbr.rel (%p200) target = $region28
        $region27: #{tpu_custom_call.1} parent=11 // pred_region
          _
        $region28: #{tpu_custom_call.1} parent=11 // pred_fallthru
          _
        // Predicated region
        $region29: #{tpu_custom_call.1} parent=11 // pred_check
          %p203 = pneg %p150
        $region30: #{tpu_custom_call.1} parent=11 // pred_check_branch
          %205 = sbr.rel (%p203) target = $region32
        $region31: #{tpu_custom_call.1} parent=11 // pred_region
          %207 = vsyncadd [#allocation7], 0
          %s208 = sshll.u32 %s5, 4
          %s209 = int_to_ptr.hbm [resolvable:$true] %s208
          %s210 = sshll.u32 [#allocation6], 4
          %s211 = int_to_ptr.vmem [resolvable:$true] %s210
          %216 = dma.hbm_to_vmem [thread:$0]  %s209, 288, %s211, [#allocation7], 32, 32, 2
        $region32: #{tpu_custom_call.1} parent=11 // pred_fallthru
          _
      $region12: #{tpu_custom_call.1} parent=5 // pred_fallthru
        _
      %p217 = scmp.lt.s32.totalorder %s19, 2
      // Predicated region
      $region33: #{tpu_custom_call.1} parent=5 // pred_check
        %p218 = pneg %p217
      $region34: #{tpu_custom_call.1} parent=5 // pred_check_branch
        %220 = sbr.rel (%p218) target = $region36
      $region35: #{tpu_custom_call.1} parent=5 // pred_region
        // Predicated region
        $region37: #{tpu_custom_call.1} parent=35 // pred_check
          %p221 = pneg %p39
        $region38: #{tpu_custom_call.1} parent=35 // pred_check_branch
          %223 = sbr.rel (%p221) target = $region40
        $region39: #{tpu_custom_call.1} parent=35 // pred_region
          %s224 = sand.u32 %s29, 1
          %s225 = scalar_lea.sflag [#allocation4], %s224
          %s226 = sand.u32 %s29, 1
          %s227 = smul.addr %s226, 8
          %s228 = scalar_lea.vmem [#allocation3], %s227
          %230 = vsyncadd %s225, 0
          %s231 = smul.addr %s19, 2
          %s232 = smul.addr %s231, 4
          %s233 = scalar_lea.hbm %s0, %s232
          %s235 = sshll.u32 %s233, 4
          %s236 = int_to_ptr.hbm [resolvable:$true] %s235
          %s237 = sshll.u32 %s228, 4
          %s238 = int_to_ptr.vmem [resolvable:$true] %s237
          %240 = dma.hbm_to_vmem [thread:$0]  %s236, 128, %s238, %s225
        $region40: #{tpu_custom_call.1} parent=35 // pred_fallthru
          _
      $region36: #{tpu_custom_call.1} parent=5 // pred_fallthru
        _
      %p241 = scmp.le.s32.totalorder 1, %s19
      %p242 = scmp.lt.s32.totalorder %s19, 3
      %p243 = pnand %p241, %p242
      %p244 = pneg %p243
      // Predicated region
      $region41: #{tpu_custom_call.1} parent=5 // pred_check
        _
      $region42: #{tpu_custom_call.1} parent=5 // pred_check_branch
        %246 = sbr.rel (%p243) target = $region44
      $region43: #{tpu_custom_call.1} parent=5 // pred_region
        %s247 = ssub.s32 %s19, 1
        %s248 = sand.u32 %s32, 1
        %s249 = scalar_lea.sflag [#allocation4], %s248
        %s250 = sand.u32 %s32, 1
        %s251 = smul.addr %s250, 8
        %s252 = scalar_lea.vmem [#allocation3], %s251
        // Predicated region
        $region45: #{tpu_custom_call.1} parent=43 // pred_check
          %p253 = pneg %p45
        $region46: #{tpu_custom_call.1} parent=43 // pred_check_branch
          %255 = sbr.rel (%p253) target = $region48
        $region47: #{tpu_custom_call.1} parent=43 // pred_region
          %257 = dma.done %s249, 128
        $region48: #{tpu_custom_call.1} parent=43 // pred_fallthru
          _
        // Predicated region
        $region49: #{tpu_custom_call.1} parent=43 // pred_check
          %p258 = pneg %p150
        $region50: #{tpu_custom_call.1} parent=43 // pred_check_branch
          %260 = sbr.rel (%p258) target = $region52
        $region51: #{tpu_custom_call.1} parent=43 // pred_region
          %262 = dma.done [#allocation7], 288
        $region52: #{tpu_custom_call.1} parent=43 // pred_fallthru
          _
        %s263 = sand.u32 %s32, 1
        %s264 = scalar_lea.sflag [#allocation4], %s263
        %s265 = sand.u32 %s32, 1
        %s266 = smul.addr %s265, 8
        %s267 = scalar_lea.vmem [#allocation3], %s266
        %p268 = pneg %p45
        %p269 = pneg %p42
        %p270 = pneg %p66
        %p271 = pneg %p63
        %p272 = pneg %p87
        %p273 = pneg %p84
        %p274 = pneg %p108
        %p275 = pneg %p105
        %p276 = pneg %p129
        %p277 = pneg %p126
        %p278 = pneg %p150
        %p279 = pneg %p147
        %p280 = pneg %p176
        %p281 = pneg %p173
        %s282 = sand.u32 %s163, 1
        %s283 = scalar_lea.sflag [#allocation5], %s282
        %s284 = sand.u32 %s163, 1
        %s285 = smul.addr %s284, 8
        %s286 = scalar_lea.vmem [#allocation8], %s285
        %v287 = vld [vmem:[%s252] sm:$0xff]
        %288 = vst [vmem:[#allocation2] sm:$0xff] 0.0
        %289 = vst [vmem:[#allocation2 + $0x8] sm:$0xff] 0.0
        %290 = vst [vmem:[#allocation2 + $0x10] sm:$0xff] 0.0
        %291 = vst [vmem:[#allocation2 + $0x18] sm:$0xff] 0.0
        %292 = vst [vmem:[#allocation2 + $0x20] sm:$0xff] 0.0
        %293 = vst [vmem:[#allocation2 + $0x28] sm:$0xff] 0.0
        %294 = vst [vmem:[#allocation2 + $0x30] sm:$0xff] 0.0
        %295 = vst [vmem:[#allocation2 + $0x38] sm:$0xff] 0.0
        %296 = vst [vmem:[#allocation2 + $0x40] sm:$0xff] 0.0
        %297 = vst [vmem:[#allocation2 + $0x48] sm:$0xff] 0.0
        %298 = vst [vmem:[#allocation2 + $0x50] sm:$0xff] 0.0
        %299 = vst [vmem:[#allocation2 + $0x58] sm:$0xff] 0.0
        %300 = vst [vmem:[#allocation2 + $0x60] sm:$0xff] 0.0
        %301 = vst [vmem:[#allocation2 + $0x68] sm:$0xff] 0.0
        %302 = vst [vmem:[#allocation2 + $0x70] sm:$0xff] 0.0
        %303 = vst [vmem:[#allocation2 + $0x78] sm:$0xff] 0.0
        %304 = vst [vmem:[#allocation2 + $0x80] sm:$0xff] 0.0
        %305 = vst [vmem:[#allocation2 + $0x88] sm:$0xff] 0.0
        %307 = vst [vmem:[#allocation1] ss:$2 sm:$0xff] %v287
        %v308 = vld.sshfl [vmem:[#allocation1] sm:$0xff pattern:$0x75316420]
        %v309 = vld.sshfl [vmem:[#allocation1 + $0x8] sm:$0xff pattern:$0x75316420]
        %312 = vrot.lane.b32.xlu0 %v308, 17
        %v313 = vpop.permute.xlu0 %312
        %314 = vrot.lane.b32.xlu0 %v309, 17
        %v315 = vpop.permute.xlu0 %314
        %v316 = vlaneseq
        %v317 = vand.u32 %v316, 127
        %vm318 = vcmp.lt.s32.totalorder %v317, 17
        %v319 = vsel %vm318, %v313, %v315
        %v320 = vsel %vm318, %v315, %v313
        %v321 = vld [vmem:[#allocation6] sm:$0x3]
        %v323 = vperm.slane %v321, 0
        %v324 = vperm.slane %v321, 1
        %v327 = vmul.f32 %v320, %v323
        %v328 = vmul.f32 %v319, %v324
        %329 = vst [vmem:[#allocation2] sm:$0xf] %v327
        %330 = vst [vmem:[#allocation2 + $0x8] sm:$0xf] %v328
        %331 = vst [vmem:[#allocation1] ss:$2 sm:$0xff] %v287
        %v332 = vld.sshfl [vmem:[#allocation1] sm:$0xff pattern:$0x75316420]
        %v333 = vld.sshfl [vmem:[#allocation1 + $0x8] sm:$0xff pattern:$0x75316420]
        %336 = vrot.lane.b32.xlu0 %v332, 16
        %v337 = vpop.permute.xlu0 %336
        %338 = vrot.lane.b32.xlu0 %v333, 16
        %v339 = vpop.permute.xlu0 %338
        %vm340 = vcmp.lt.s32.totalorder %v317, 16
        %v341 = vsel %vm340, %v337, %v339
        %v342 = vsel %vm340, %v339, %v337
        %s343 = scalar_lea.vmem [#allocation6], 2
        %v344 = vld [vmem:[%s343] sm:$0x3]
        %v346 = vperm.slane %v344, 0
        %v347 = vperm.slane %v344, 1
        %v350 = vmul.f32 %v342, %v346
        %v351 = vmul.f32 %v341, %v347
        %352 = vst [vmem:[#allocation2 + $0x10] sm:$0xf] %v350
        %353 = vst [vmem:[#allocation2 + $0x18] sm:$0xf] %v351
        %354 = vst [vmem:[#allocation1] ss:$2 sm:$0xff] %v287
        %v355 = vld.sshfl [vmem:[#allocation1] sm:$0xff pattern:$0x75316420]
        %v356 = vld.sshfl [vmem:[#allocation1 + $0x8] sm:$0xff pattern:$0x75316420]
        %359 = vrot.lane.b32.xlu0 %v355, 15
        %v360 = vpop.permute.xlu0 %359
        %361 = vrot.lane.b32.xlu0 %v356, 15
        %v362 = vpop.permute.xlu0 %361
        %vm363 = vcmp.lt.s32.totalorder %v317, 15
        %v364 = vsel %vm363, %v360, %v362
        %v365 = vsel %vm363, %v362, %v360
        %s366 = scalar_lea.vmem [#allocation6], 4
        %v367 = vld [vmem:[%s366] sm:$0x3]
        %v369 = vperm.slane %v367, 0
        %v370 = vperm.slane %v367, 1
        %v373 = vmul.f32 %v365, %v369
        %v374 = vmul.f32 %v364, %v370
        %375 = vst [vmem:[#allocation2 + $0x20] sm:$0xf] %v373
        %376 = vst [vmem:[#allocation2 + $0x28] sm:$0xf] %v374
        %377 = vst [vmem:[#allocation1] ss:$2 sm:$0xff] %v287
        %v378 = vld.sshfl [vmem:[#allocation1] sm:$0xff pattern:$0x75316420]
        %v379 = vld.sshfl [vmem:[#allocation1 + $0x8] sm:$0xff pattern:$0x75316420]
        %382 = vrot.lane.b32.xlu0 %v378, 1
        %v383 = vpop.permute.xlu0 %382
        %384 = vrot.lane.b32.xlu0 %v379, 1
        %v385 = vpop.permute.xlu0 %384
        %vm386 = vcmp.lt.s32.totalorder %v317, 1
        %v387 = vsel %vm386, %v383, %v385
        %v388 = vsel %vm386, %v385, %v383
        %s389 = scalar_lea.vmem [#allocation6], 6
        %v390 = vld [vmem:[%s389] sm:$0x3]
        %v392 = vperm.slane %v390, 0
        %v393 = vperm.slane %v390, 1
        %v396 = vmul.f32 %v388, %v392
        %v397 = vmul.f32 %v387, %v393
        %398 = vst [vmem:[#allocation2 + $0x30] sm:$0xf] %v396
        %399 = vst [vmem:[#allocation2 + $0x38] sm:$0xf] %v397
        %400 = vst [vmem:[#allocation1] ss:$2 sm:$0xff] %v287
        %v401 = vld.sshfl [vmem:[#allocation1] sm:$0xff pattern:$0x75316420]
        %v402 = vld.sshfl [vmem:[#allocation1 + $0x8] sm:$0xff pattern:$0x75316420]
        %405 = vst [vmem:[#allocation2 + $0x40] sm:$0xf] %v401
        %406 = vst [vmem:[#allocation2 + $0x48] sm:$0xf] %v402
        %407 = vst [vmem:[#allocation1] ss:$2 sm:$0xff] %v287
        %v408 = vld.sshfl [vmem:[#allocation1] sm:$0xff pattern:$0x75316420]
        %v409 = vld.sshfl [vmem:[#allocation1 + $0x8] sm:$0xff pattern:$0x75316420]
        %412 = vrot.lane.b32.xlu0 %v408, 127
        %v413 = vpop.permute.xlu0 %412
        %414 = vrot.lane.b32.xlu0 %v409, 127
        %v415 = vpop.permute.xlu0 %414
        %vm416 = vcmp.lt.s32.totalorder %v317, 127
        %v417 = vsel %vm416, %v413, %v415
        %v418 = vsel %vm416, %v415, %v413
        %s419 = scalar_lea.vmem [#allocation6], 10
        %v420 = vld [vmem:[%s419] sm:$0x3]
        %v422 = vperm.slane %v420, 0
        %v423 = vperm.slane %v420, 1
        %v426 = vmul.f32 %v417, %v422
        %v427 = vmul.f32 %v418, %v423
        %428 = vst [vmem:[#allocation2 + $0x50] sm:$0xf] %v426
        %429 = vst [vmem:[#allocation2 + $0x58] sm:$0xf] %v427
        %430 = vst [vmem:[#allocation1] ss:$2 sm:$0xff] %v287
        %v431 = vld.sshfl [vmem:[#allocation1] sm:$0xff pattern:$0x75316420]
        %v432 = vld.sshfl [vmem:[#allocation1 + $0x8] sm:$0xff pattern:$0x75316420]
        %435 = vrot.lane.b32.xlu0 %v431, 113
        %v436 = vpop.permute.xlu0 %435
        %437 = vrot.lane.b32.xlu0 %v432, 113
        %v438 = vpop.permute.xlu0 %437
        %vm439 = vcmp.lt.s32.totalorder %v317, 113
        %v440 = vsel %vm439, %v436, %v438
        %v441 = vsel %vm439, %v438, %v436
        %s442 = scalar_lea.vmem [#allocation6], 12
        %v443 = vld [vmem:[%s442] sm:$0x3]
        %v445 = vperm.slane %v443, 0
        %v446 = vperm.slane %v443, 1
        %v449 = vmul.f32 %v440, %v445
        %v450 = vmul.f32 %v441, %v446
        %451 = vst [vmem:[#allocation2 + $0x60] sm:$0xf] %v449
        %452 = vst [vmem:[#allocation2 + $0x68] sm:$0xf] %v450
        %453 = vst [vmem:[#allocation1] ss:$2 sm:$0xff] %v287
        %v454 = vld.sshfl [vmem:[#allocation1] sm:$0xff pattern:$0x75316420]
        %v455 = vld.sshfl [vmem:[#allocation1 + $0x8] sm:$0xff pattern:$0x75316420]
        %458 = vrot.lane.b32.xlu0 %v454, 112
        %v459 = vpop.permute.xlu0 %458
        %460 = vrot.lane.b32.xlu0 %v455, 112
        %v461 = vpop.permute.xlu0 %460
        %vm462 = vcmp.lt.s32.totalorder %v317, 112
        %v463 = vsel %vm462, %v459, %v461
        %v464 = vsel %vm462, %v461, %v459
        %s465 = scalar_lea.vmem [#allocation6], 14
        %v466 = vld [vmem:[%s465] sm:$0x3]
        %v468 = vperm.slane %v466, 0
        %v469 = vperm.slane %v466, 1
        %v472 = vmul.f32 %v463, %v468
        %v473 = vmul.f32 %v464, %v469
        %474 = vst [vmem:[#allocation2 + $0x70] sm:$0xf] %v472
        %475 = vst [vmem:[#allocation2 + $0x78] sm:$0xf] %v473
        %476 = vst [vmem:[#allocation1] ss:$2 sm:$0xff] %v287
        %v477 = vld.sshfl [vmem:[#allocation1] sm:$0xff pattern:$0x75316420]
        %v478 = vld.sshfl [vmem:[#allocation1 + $0x8] sm:$0xff pattern:$0x75316420]
        %481 = vrot.lane.b32.xlu0 %v477, 111
        %v482 = vpop.permute.xlu0 %481
        %483 = vrot.lane.b32.xlu0 %v478, 111
        %v484 = vpop.permute.xlu0 %483
        %vm485 = vcmp.lt.s32.totalorder %v317, 111
        %v486 = vsel %vm485, %v482, %v484
        %v487 = vsel %vm485, %v484, %v482
        %s488 = scalar_lea.vmem [#allocation6], 16
        %v489 = vld [vmem:[%s488] sm:$0x3]
        %v491 = vperm.slane %v489, 0
        %v492 = vperm.slane %v489, 1
        %v495 = vmul.f32 %v486, %v491
        %v496 = vmul.f32 %v487, %v492
        %497 = vst [vmem:[#allocation2 + $0x80] sm:$0xf] %v495
        %498 = vst [vmem:[#allocation2 + $0x88] sm:$0xf] %v496
        %v499 = vld [vmem:[%s1] sm:$0xf]
        %v500 = vld [vmem:[#allocation2] sm:$0xff]
        %v501 = vld [vmem:[#allocation2 + $0x8] sm:$0xff]
        %v502 = vld [vmem:[#allocation2 + $0x10] sm:$0xff]
        %v503 = vld [vmem:[#allocation2 + $0x18] sm:$0xff]
        %v504 = vld [vmem:[#allocation2 + $0x20] sm:$0xff]
        %v505 = vld [vmem:[#allocation2 + $0x28] sm:$0xff]
        %v506 = vld [vmem:[#allocation2 + $0x30] sm:$0xff]
        %v507 = vld [vmem:[#allocation2 + $0x38] sm:$0xff]
        %v508 = vld [vmem:[#allocation2 + $0x40] sm:$0xff]
        %v509 = vld [vmem:[#allocation2 + $0x48] sm:$0xff]
        %v510 = vld [vmem:[#allocation2 + $0x50] sm:$0xff]
        %v511 = vld [vmem:[#allocation2 + $0x58] sm:$0xff]
        %v512 = vld [vmem:[#allocation2 + $0x60] sm:$0xff]
        %v513 = vld [vmem:[#allocation2 + $0x68] sm:$0xff]
        %v514 = vld [vmem:[#allocation2 + $0x70] sm:$0xff]
        %v515 = vld [vmem:[#allocation2 + $0x78] sm:$0xff]
        %v516 = vld [vmem:[#allocation2 + $0x80] sm:$0xff]
        %v517 = vld [vmem:[#allocation2 + $0x88] sm:$0xff]
        %v518 = vld [vmem:[%s2] sm:$0xf]
        %520 = vset.pattern.permute.xlu0 0
        %521 = vperm.xlu0 %520, %v518
        %v522 = vpop.permute.xlu0 %521
        %vm524 = vcmask 588800
        %v526 = vsel %vm524, %v499, 0
        %528 = vmatpush.msra.mxu0 0.0
        %529 = vmatpush.msra.mxu0 0.0
        %530 = vmatpush.msra.mxu0 0.0
        %531 = vmatpush.msra.mxu0 0.0
        %532 = vmatpush.msra.mxu0 0.0
        %533 = vmatpush.msra.mxu0 0.0
        %534 = vmatpush.msra.mxu0 0.0
        %535 = vmatpush.msra.mxu0 %v516
        %536 = vmatpush.msra.mxu0 %v514
        %537 = vmatpush.msra.mxu0 %v512
        %538 = vmatpush.msra.mxu0 %v510
        %539 = vmatpush.msra.mxu0 %v508
        %540 = vmatpush.msra.mxu0 %v506
        %541 = vmatpush.msra.mxu0 %v504
        %542 = vmatpush.msra.mxu0 %v502
        %543 = vmatpush.msra.mxu0 %v500
        %544 = vmatmul.f32.gmra.mxu0 %v526
        %v545 = vpop.f32.mrf.mxu0
        %v546 = vadd.f32 %v522, %v545
        %547 = vdwg.mxu0
        %548 = vmatpush.msra.mxu0 0.0
        %549 = vmatpush.msra.mxu0 0.0
        %550 = vmatpush.msra.mxu0 0.0
        %551 = vmatpush.msra.mxu0 0.0
        %552 = vmatpush.msra.mxu0 0.0
        %553 = vmatpush.msra.mxu0 0.0
        %554 = vmatpush.msra.mxu0 0.0
        %555 = vmatpush.msra.mxu0 %v517
        %556 = vmatpush.msra.mxu0 %v515
        %557 = vmatpush.msra.mxu0 %v513
        %558 = vmatpush.msra.mxu0 %v511
        %559 = vmatpush.msra.mxu0 %v509
        %560 = vmatpush.msra.mxu0 %v507
        %561 = vmatpush.msra.mxu0 %v505
        %562 = vmatpush.msra.mxu0 %v503
        %563 = vmatpush.msra.mxu0 %v501
        %564 = vmatmul.f32.gmra.mxu0 %v526
        %v565 = vpop.f32.mrf.mxu0
        %v566 = vadd.f32 %v522, %v565
        %567 = vdwg.mxu0
        %vm568 = vcmp.ge.f32.partialorder %v546, 0.0
        %vm569 = vcmp.ge.f32.partialorder %v566, 0.0
        %v570 = vmul.f32 %v546, 0.01
        %v571 = vmul.f32 %v566, 0.01
        %v572 = vsel %vm568, %v546, %v570
        %v573 = vsel %vm569, %v566, %v571
        %574 = vrot.lane.b32.xlu0 %v572, 17
        %v575 = vpop.permute.xlu0 %574
        %576 = vrot.lane.b32.xlu0 %v573, 17
        %v577 = vpop.permute.xlu0 %576
        %v578 = vsel %vm318, %v575, %v577
        %v579 = vsel %vm318, %v577, %v575
        %v580 = vld [vmem:[#allocation6] sm:$0x3]
        %v582 = vperm.slane %v580, 0
        %v583 = vperm.slane %v580, 1
        %v586 = vmul.f32 %v579, %v582
        %v587 = vmul.f32 %v578, %v583
        %588 = vst [vmem:[#allocation2] sm:$0xf] %v586
        %589 = vst [vmem:[#allocation2 + $0x8] sm:$0xf] %v587
        %590 = vrot.lane.b32.xlu0 %v572, 16
        %v591 = vpop.permute.xlu0 %590
        %592 = vrot.lane.b32.xlu0 %v573, 16
        %v593 = vpop.permute.xlu0 %592
        %v594 = vsel %vm340, %v591, %v593
        %v595 = vsel %vm340, %v593, %v591
        %v596 = vld [vmem:[%s343] sm:$0x3]
        %v598 = vperm.slane %v596, 0
        %v599 = vperm.slane %v596, 1
        %v602 = vmul.f32 %v595, %v598
        %v603 = vmul.f32 %v594, %v599
        %604 = vst [vmem:[#allocation2 + $0x10] sm:$0xf] %v602
        %605 = vst [vmem:[#allocation2 + $0x18] sm:$0xf] %v603
        %606 = vrot.lane.b32.xlu0 %v572, 15
        %v607 = vpop.permute.xlu0 %606
        %608 = vrot.lane.b32.xlu0 %v573, 15
        %v609 = vpop.permute.xlu0 %608
        %v610 = vsel %vm363, %v607, %v609
        %v611 = vsel %vm363, %v609, %v607
        %v612 = vld [vmem:[%s366] sm:$0x3]
        %v614 = vperm.slane %v612, 0
        %v615 = vperm.slane %v612, 1
        %v618 = vmul.f32 %v611, %v614
        %v619 = vmul.f32 %v610, %v615
        %620 = vst [vmem:[#allocation2 + $0x20] sm:$0xf] %v618
        %621 = vst [vmem:[#allocation2 + $0x28] sm:$0xf] %v619
        %622 = vrot.lane.b32.xlu0 %v572, 1
        %v623 = vpop.permute.xlu0 %622
        %624 = vrot.lane.b32.xlu0 %v573, 1
        %v625 = vpop.permute.xlu0 %624
        %v626 = vsel %vm386, %v623, %v625
        %v627 = vsel %vm386, %v625, %v623
        %v628 = vld [vmem:[%s389] sm:$0x3]
        %v630 = vperm.slane %v628, 0
        %v631 = vperm.slane %v628, 1
        %v634 = vmul.f32 %v627, %v630
        %v635 = vmul.f32 %v626, %v631
        %636 = vst [vmem:[#allocation2 + $0x30] sm:$0xf] %v634
        %637 = vst [vmem:[#allocation2 + $0x38] sm:$0xf] %v635
        %638 = vst [vmem:[#allocation2 + $0x40] sm:$0xf] %v572
        %639 = vst [vmem:[#allocation2 + $0x48] sm:$0xf] %v573
        %640 = vrot.lane.b32.xlu0 %v572, 127
        %v641 = vpop.permute.xlu0 %640
        %642 = vrot.lane.b32.xlu0 %v573, 127
        %v643 = vpop.permute.xlu0 %642
        %v644 = vsel %vm416, %v641, %v643
        %v645 = vsel %vm416, %v643, %v641
        %v646 = vld [vmem:[%s419] sm:$0x3]
        %v648 = vperm.slane %v646, 0
        %v649 = vperm.slane %v646, 1
        %v652 = vmul.f32 %v644, %v648
        %v653 = vmul.f32 %v645, %v649
        %654 = vst [vmem:[#allocation2 + $0x50] sm:$0xf] %v652
        %655 = vst [vmem:[#allocation2 + $0x58] sm:$0xf] %v653
        %656 = vrot.lane.b32.xlu0 %v572, 113
        %v657 = vpop.permute.xlu0 %656
        %658 = vrot.lane.b32.xlu0 %v573, 113
        %v659 = vpop.permute.xlu0 %658
        %v660 = vsel %vm439, %v657, %v659
        %v661 = vsel %vm439, %v659, %v657
        %v662 = vld [vmem:[%s442] sm:$0x3]
        %v664 = vperm.slane %v662, 0
        %v665 = vperm.slane %v662, 1
        %v668 = vmul.f32 %v660, %v664
        %v669 = vmul.f32 %v661, %v665
        %670 = vst [vmem:[#allocation2 + $0x60] sm:$0xf] %v668
        %671 = vst [vmem:[#allocation2 + $0x68] sm:$0xf] %v669
        %672 = vrot.lane.b32.xlu0 %v572, 112
        %v673 = vpop.permute.xlu0 %672
        %674 = vrot.lane.b32.xlu0 %v573, 112
        %v675 = vpop.permute.xlu0 %674
        %v676 = vsel %vm462, %v673, %v675
        %v677 = vsel %vm462, %v675, %v673
        %v678 = vld [vmem:[%s465] sm:$0x3]
        %v680 = vperm.slane %v678, 0
        %v681 = vperm.slane %v678, 1
        %v684 = vmul.f32 %v676, %v680
        %v685 = vmul.f32 %v677, %v681
        %686 = vst [vmem:[#allocation2 + $0x70] sm:$0xf] %v684
        %687 = vst [vmem:[#allocation2 + $0x78] sm:$0xf] %v685
        %688 = vrot.lane.b32.xlu0 %v572, 111
        %v689 = vpop.permute.xlu0 %688
        %690 = vrot.lane.b32.xlu0 %v573, 111
        %v691 = vpop.permute.xlu0 %690
        %v692 = vsel %vm485, %v689, %v691
        %v693 = vsel %vm485, %v691, %v689
        %v694 = vld [vmem:[%s488] sm:$0x3]
        %v696 = vperm.slane %v694, 0
        %v697 = vperm.slane %v694, 1
        %v700 = vmul.f32 %v692, %v696
        %v701 = vmul.f32 %v693, %v697
        %702 = vst [vmem:[#allocation2 + $0x80] sm:$0xf] %v700
        %703 = vst [vmem:[#allocation2 + $0x88] sm:$0xf] %v701
        %v704 = vld [vmem:[%s3] sm:$0xf]
        %v705 = vld [vmem:[#allocation2] sm:$0xff]
        %v706 = vld [vmem:[#allocation2 + $0x8] sm:$0xff]
        %v707 = vld [vmem:[#allocation2 + $0x10] sm:$0xff]
        %v708 = vld [vmem:[#allocation2 + $0x18] sm:$0xff]
        %v709 = vld [vmem:[#allocation2 + $0x20] sm:$0xff]
        %v710 = vld [vmem:[#allocation2 + $0x28] sm:$0xff]
        %v711 = vld [vmem:[#allocation2 + $0x30] sm:$0xff]
        %v712 = vld [vmem:[#allocation2 + $0x38] sm:$0xff]
        %v713 = vld [vmem:[#allocation2 + $0x40] sm:$0xff]
        %v714 = vld [vmem:[#allocation2 + $0x48] sm:$0xff]
        %v715 = vld [vmem:[#allocation2 + $0x50] sm:$0xff]
        %v716 = vld [vmem:[#allocation2 + $0x58] sm:$0xff]
        %v717 = vld [vmem:[#allocation2 + $0x60] sm:$0xff]
        %v718 = vld [vmem:[#allocation2 + $0x68] sm:$0xff]
        %v719 = vld [vmem:[#allocation2 + $0x70] sm:$0xff]
        %v720 = vld [vmem:[#allocation2 + $0x78] sm:$0xff]
        %v721 = vld [vmem:[#allocation2 + $0x80] sm:$0xff]
        %v722 = vld [vmem:[#allocation2 + $0x88] sm:$0xff]
        %v723 = vld [vmem:[%s4] sm:$0xf]
        %725 = vset.pattern.permute.xlu0 0
        %726 = vperm.xlu0 %725, %v723
        %v727 = vpop.permute.xlu0 %726
        %v730 = vsel %vm524, %v704, 0
        %732 = vmatpush.msra.mxu0 0.0
        %733 = vmatpush.msra.mxu0 0.0
        %734 = vmatpush.msra.mxu0 0.0
        %735 = vmatpush.msra.mxu0 0.0
        %736 = vmatpush.msra.mxu0 0.0
        %737 = vmatpush.msra.mxu0 0.0
        %738 = vmatpush.msra.mxu0 0.0
        %739 = vmatpush.msra.mxu0 %v721
        %740 = vmatpush.msra.mxu0 %v719
        %741 = vmatpush.msra.mxu0 %v717
        %742 = vmatpush.msra.mxu0 %v715
        %743 = vmatpush.msra.mxu0 %v713
        %744 = vmatpush.msra.mxu0 %v711
        %745 = vmatpush.msra.mxu0 %v709
        %746 = vmatpush.msra.mxu0 %v707
        %747 = vmatpush.msra.mxu0 %v705
        %748 = vmatmul.f32.gmra.mxu0 %v730
        %v749 = vpop.f32.mrf.mxu0
        %v750 = vadd.f32 %v727, %v749
        %751 = vdwg.mxu0
        %752 = vmatpush.msra.mxu0 0.0
        %753 = vmatpush.msra.mxu0 0.0
        %754 = vmatpush.msra.mxu0 0.0
        %755 = vmatpush.msra.mxu0 0.0
        %756 = vmatpush.msra.mxu0 0.0
        %757 = vmatpush.msra.mxu0 0.0
        %758 = vmatpush.msra.mxu0 0.0
        %759 = vmatpush.msra.mxu0 %v722
        %760 = vmatpush.msra.mxu0 %v720
        %761 = vmatpush.msra.mxu0 %v718
        %762 = vmatpush.msra.mxu0 %v716
        %763 = vmatpush.msra.mxu0 %v714
        %764 = vmatpush.msra.mxu0 %v712
        %765 = vmatpush.msra.mxu0 %v710
        %766 = vmatpush.msra.mxu0 %v708
        %767 = vmatpush.msra.mxu0 %v706
        %768 = vmatmul.f32.gmra.mxu0 %v730
        %v769 = vpop.f32.mrf.mxu0
        %v770 = vadd.f32 %v727, %v769
        %771 = vdwg.mxu0
        %772 = vst [vmem:[#allocation1] ss:$2 sm:$0xff] %v287
        %v773 = vld.sshfl [vmem:[#allocation1] sm:$0xff pattern:$0x75316420]
        %v774 = vld.sshfl [vmem:[#allocation1 + $0x8] sm:$0xff pattern:$0x75316420]
        %v777 = vadd.f32 %v750, %v773
        %v778 = vadd.f32 %v770, %v774
        %vm779 = vcmp.ge.f32.partialorder %v777, 0.0
        %vm780 = vcmp.ge.f32.partialorder %v778, 0.0
        %v781 = vmul.f32 %v777, 0.01
        %v782 = vmul.f32 %v778, 0.01
        %v783 = vsel %vm779, %v777, %v781
        %v784 = vsel %vm780, %v778, %v782
        %v787 = vrot.slane %v784, 4
        %vm788 = vcmask 1043456
        %v789 = vsel %vm788, %v783, %v787
        %791 = vst [vmem:[%s286] sm:$0xff] %v789
        %s792 = sand.u32 %s163, 1
        %s793 = scalar_lea.sflag [#allocation5], %s792
        %s794 = sand.u32 %s163, 1
        %s795 = smul.addr %s794, 8
        %s796 = scalar_lea.vmem [#allocation8], %s795
        // Predicated region
        $region53: #{tpu_custom_call.1} parent=43 // pred_check
          %p797 = pneg %p173
        $region54: #{tpu_custom_call.1} parent=43 // pred_check_branch
          %799 = sbr.rel (%p797) target = $region56
        $region55: #{tpu_custom_call.1} parent=43 // pred_region
          %801 = vsyncadd %s793, 0
          %s802 = smul.addr %s24, 2
          %s803 = smul.addr %s802, 4
          %s804 = scalar_lea.hbm %s6, %s803
          %s806 = sshll.u32 %s796, 4
          %s807 = int_to_ptr.vmem [resolvable:$true] %s806
          %s808 = sshll.u32 %s804, 4
          %s809 = int_to_ptr.hbm [resolvable:$true] %s808
          %811 = dma.vmem_to_hbm [thread:$0]  %s807, 128, %s809, %s793
        $region56: #{tpu_custom_call.1} parent=43 // pred_fallthru
          _
      $region44: #{tpu_custom_call.1} parent=5 // pred_fallthru
        _
      %p812 = scmp.le.s32.totalorder 2, %s19
      // Predicated region
      $region57: #{tpu_custom_call.1} parent=5 // pred_check
        %p813 = pneg %p812
      $region58: #{tpu_custom_call.1} parent=5 // pred_check_branch
        %815 = sbr.rel (%p813) target = $region60
      $region59: #{tpu_custom_call.1} parent=5 // pred_region
        %s816 = ssub.s32 %s19, 2
        // Predicated region
        $region61: #{tpu_custom_call.1} parent=59 // pred_check
          %p817 = pneg %p179
        $region62: #{tpu_custom_call.1} parent=59 // pred_check_branch
          %819 = sbr.rel (%p817) target = $region64
        $region63: #{tpu_custom_call.1} parent=59 // pred_region
          %s820 = sand.u32 %s164, 1
          %s821 = scalar_lea.sflag [#allocation5], %s820
          %s822 = sand.u32 %s164, 1
          %s823 = smul.addr %s822, 8
          %s824 = scalar_lea.vmem [#allocation8], %s823
          %826 = dma.done %s821, 128
        $region64: #{tpu_custom_call.1} parent=59 // pred_fallthru
          _
      $region60: #{tpu_custom_call.1} parent=5 // pred_fallthru
        _
    $region6: #{tpu_custom_call.1} parent=1 // loop_footer
      %s23 = sadd.s32 1, %s19
    $region7: #{tpu_custom_call.1} parent=1 // loop_footer_branch
      %18 = sbr.rel target = $region3
    $region8: #{tpu_custom_call.1} parent=1 // loop_exit
      _
    %827 = vsyncpa [#allocation4], 1
    %s828 = scalar_lea.sflag [#allocation4], 1
    %829 = vsyncpa %s828, 1
    %830 = vsyncpa [#allocation7], 1
    %831 = vsyncpa [#allocation5], 1
    %s832 = scalar_lea.sflag [#allocation5], 1
    %833 = vsyncpa %s832, 1

</llo_original>
